<compile_context>
chip_gen: v6e
topology: v6e:2x2x1
jax: 0.10.0
libtpu: 0.0.40
codegen_flags: <defaults>
</compile_context>

<pallas_src>
import jax
import jax.numpy as jnp
from jax.experimental import pallas as pl
from jax.experimental.pallas import tpu as pltpu


def _round_up(n, m):
    return ((n + m - 1) // m) * m


def _vmem_capacity_bytes():
    """Per-core VMEM capacity (128 MiB on v5e/v6e, 64 MiB per TC on v7x)."""
    try:
        return int(pltpu.get_tpu_info().vmem_capacity_bytes)
    except Exception:
        return 64 * 1024 * 1024  # conservative default if query unavailable


def _pad2d(a, rows, cols, dtype):
    """Zero-pad a 2-D array to (rows, cols) in `dtype`; skips the pad copy
    when the array already has the target shape."""
    a = jnp.asarray(a).astype(dtype)
    if a.shape == (rows, cols):
        return a
    return jnp.zeros((rows, cols), dtype).at[:a.shape[0], :a.shape[1]].set(a)


def _spec(shape, index_map, mode=None):
    # Only pass pipeline_mode when requested, so the no-mode path never
    # depends on the kwarg existing.
    if mode is None:
        return pl.BlockSpec(shape, index_map)
    return pl.BlockSpec(shape, index_map, pipeline_mode=mode)


# --------------------------------------------------------------------------
# Kernels
# --------------------------------------------------------------------------
def _mlp_kernel(x_ref, w1_ref, b1_ref, w2_ref, b2_ref, o_ref):
    """Weights fully resident in VMEM; one batch tile per grid step."""
    h = jnp.dot(x_ref[...], w1_ref[...], preferred_element_type=jnp.float32)
    h = jnp.maximum(h + b1_ref[...], 0.0)
    y = jnp.dot(h.astype(w2_ref.dtype), w2_ref[...],
                preferred_element_type=jnp.float32)
    o_ref[...] = (y + b2_ref[...]).astype(o_ref.dtype)


def _mlp_kernel_hid_tiled(x_ref, w1_ref, b1_ref, w2_ref, b2_ref, o_ref,
                          acc_ref):
    """D_hid tiled along grid axis 1 (reduction); weights streamed per block."""
    j = pl.program_id(1)

    @pl.when(j == 0)
    def _():
        acc_ref[...] = jnp.zeros_like(acc_ref)

    h = jnp.dot(x_ref[...], w1_ref[...], preferred_element_type=jnp.float32)
    h = jnp.maximum(h + b1_ref[...], 0.0)
    acc_ref[...] += jnp.dot(h.astype(w2_ref.dtype), w2_ref[...],
                            preferred_element_type=jnp.float32)

    @pl.when(j == pl.num_programs(1) - 1)
    def _():
        o_ref[...] = (acc_ref[...] + b2_ref[...]).astype(o_ref.dtype)


# --------------------------------------------------------------------------
# Wrapper
# --------------------------------------------------------------------------
def prepare_mlp_params(w1, b1, w2, b2, *, compute_dtype=None):
    """Pad/cast the parameters once (lane-dense 128-multiples, [in, out]
    layout).  Cache and reuse the result across forward calls to avoid
    re-padding the weights every step."""
    if compute_dtype is None:
        compute_dtype = w1.dtype           # pass jnp.bfloat16 for the fast path
    compute_dtype = jnp.dtype(compute_dtype)
    D_in, D_hid = w1.shape
    D_out = w2.shape[1]
    D_in_p = _round_up(D_in, 128)
    D_hid_p = _round_up(D_hid, 128)
    D_out_p = _round_up(D_out, 128)
    return dict(
        w1=_pad2d(w1, D_in_p, D_hid_p, compute_dtype),
        b1=_pad2d(jnp.asarray(b1).reshape(1, -1), 1, D_hid_p, jnp.float32),
        w2=_pad2d(w2, D_hid_p, D_out_p, compute_dtype),
        b2=_pad2d(jnp.asarray(b2).reshape(1, -1), 1, D_out_p, jnp.float32),
        dims=(D_in, D_hid, D_out),
        compute_dtype=compute_dtype,
    )


def mlp_forward_prepared(x, params, *, tile_b=512, hid_tile=None,
                         stream_buffers=2):
    """Forward pass with pre-padded parameters (see prepare_mlp_params)."""
    D_in, D_hid, D_out = params["dims"]
    w1_p, b1_p, w2_p, b2_p = (params["w1"], params["b1"],
                              params["w2"], params["b2"])
    compute_dtype = params["compute_dtype"]
    itm = compute_dtype.itemsize
    D_in_p, D_hid_p = w1_p.shape
    D_out_p = w2_p.shape[1]

    B = x.shape[0]
    out_dtype = x.dtype
    out_itm = jnp.dtype(out_dtype).itemsize

    # Batch tile: sublane multiple (16 rows for bf16 packing), clamped to the
    # (rounded) batch so tiny demos do not over-pad.
    sub = 16 if itm == 2 else 8
    tile_b = max(sub, _round_up(min(tile_b, _round_up(B, sub)), sub))
    B_p = _round_up(B, tile_b)

    # Pad / cast x only when needed (skip the extra HBM pass when aligned).
    x_p = x.astype(compute_dtype)
    if x_p.shape != (B_p, D_in_p):
        x_p = jnp.zeros((B_p, D_in_p), compute_dtype).at[:B, :D_in].set(x_p)

    cap = _vmem_capacity_bytes()
    budget = int(cap * 0.85)              # headroom for Mosaic scratch
    vmem_floor = 32 * 1024 * 1024
    x_mode = pl.Buffered(stream_buffers) if stream_buffers != 2 else None

    # ---- Path 1: weights fully resident in VMEM --------------------------
    def resident_est(weight_bufs):
        return (weight_bufs * (D_in_p * D_hid_p + D_hid_p * D_out_p) * itm
                + weight_bufs * (D_hid_p + D_out_p) * 4
                + stream_buffers * tile_b * D_in_p * itm
                + 2 * tile_b * D_out_p * out_itm
                + tile_b * D_hid_p * 4)

    def run_resident(single_buffer_weights):
        weight_bufs = 1 if single_buffer_weights else 2
        wmode = pl.Buffered(1) if single_buffer_weights else None
        vmem_limit = int(min(max(resident_est(weight_bufs) * 5 // 4,
                                 vmem_floor), budget))
        return pl.pallas_call(
            _mlp_kernel,
            out_shape=jax.ShapeDtypeStruct((B_p, D_out_p), out_dtype),
            grid_spec=pltpu.PrefetchScalarGridSpec(
                num_scalar_prefetch=0,
                grid=(B_p // tile_b,),
                in_specs=[
                    _spec((tile_b, D_in_p), lambda i: (i, 0), x_mode),   # x
                    _spec((D_in_p, D_hid_p), lambda i: (0, 0), wmode),   # w1
                    _spec((1, D_hid_p), lambda i: (0, 0), wmode),        # b1
                    _spec((D_hid_p, D_out_p), lambda i: (0, 0), wmode),  # w2
                    _spec((1, D_out_p), lambda i: (0, 0), wmode),        # b2
                ],
                out_specs=pl.BlockSpec((tile_b, D_out_p), lambda i: (i, 0)),
            ),
            compiler_params=pltpu.CompilerParams(
                dimension_semantics=("parallel",),
                vmem_limit_bytes=vmem_limit),
        )(x_p, w1_p, b1_p, w2_p, b2_p)

    # ---- Path 2: D_hid tiled (weights streamed), for big models / v7x ----
    def tiled_est(th):
        return (2 * (D_in_p * th + th * D_out_p) * itm
                + 2 * th * 4 + 2 * D_out_p * 4
                + 2 * tile_b * D_in_p * itm
                + 2 * tile_b * D_out_p * out_itm
                + tile_b * D_out_p * 4        # f32 accumulator scratch
                + tile_b * th * 4)            # hidden intermediate

    def run_hid_tiled(th):
        vmem_limit = int(min(max(tiled_est(th) * 5 // 4, vmem_floor), budget))
        return pl.pallas_call(
            _mlp_kernel_hid_tiled,
            out_shape=jax.ShapeDtypeStruct((B_p, D_out_p), out_dtype),
            grid_spec=pltpu.PrefetchScalarGridSpec(
                num_scalar_prefetch=0,
                grid=(B_p // tile_b, D_hid_p // th),
                in_specs=[
                    pl.BlockSpec((tile_b, D_in_p), lambda i, j: (i, 0)),
                    pl.BlockSpec((D_in_p, th), lambda i, j: (0, j)),
                    pl.BlockSpec((1, th), lambda i, j: (0, j)),
                    pl.BlockSpec((th, D_out_p), lambda i, j: (j, 0)),
                    pl.BlockSpec((1, D_out_p), lambda i, j: (0, 0)),
                ],
                out_specs=pl.BlockSpec((tile_b, D_out_p), lambda i, j: (i, 0)),
                scratch_shapes=[pltpu.VMEM((tile_b, D_out_p), jnp.float32)],
            ),
            compiler_params=pltpu.CompilerParams(
                dimension_semantics=("parallel", "arbitrary"),
                vmem_limit_bytes=vmem_limit),
        )(x_p, w1_p, b1_p, w2_p, b2_p)

    use_resident = hid_tile is None and resident_est(1) * 5 // 4 <= budget
    if use_resident:
        try:
            out_p = run_resident(True)       # single-buffered resident weights
        except Exception:
            out_p = run_resident(False)      # fallback: default double-buffer
    else:
        if hid_tile is not None:
            cap_th = max(128, _round_up(min(hid_tile, D_hid_p), 128))
            th = max(d for d in range(128, D_hid_p + 1, 128)
                     if D_hid_p % d == 0 and d <= cap_th)
        else:
            candidates = [d for d in range(D_hid_p, 0, -128)
                          if D_hid_p % d == 0]
            th = next((d for d in candidates
                       if tiled_est(d) * 5 // 4 <= budget), candidates[-1])
        out_p = run_hid_tiled(th)

    if (B_p, D_out_p) != (B, D_out):
        out_p = out_p[:B, :D_out]
    return out_p


def mlp_forward(x, w1, b1, w2, b2, *, compute_dtype=None, tile_b=512,
                hid_tile=None, stream_buffers=2):
    """Convenience wrapper: pads params per call.  For repeated calls, use
    prepare_mlp_params once + mlp_forward_prepared."""
    params = prepare_mlp_params(w1, b1, w2, b2, compute_dtype=compute_dtype)
    return mlp_forward_prepared(x, params, tile_b=tile_b, hid_tile=hid_tile,
                                stream_buffers=stream_buffers)


def init_mlp_params(key, input_dim, output_dim, dtype=jnp.float32):
    """Parameter init matching nn.Linear shapes.  PyTorch nn.Linear(i, o)
    holds weight [o, i]; we store the transpose [i, o] so the kernel does
    x @ w."""
    hidden_dim = input_dim // 2
    k1, k2, k3, k4 = jax.random.split(key, 4)
    bound1 = 1.0 / (input_dim ** 0.5)
    bound2 = 1.0 / (hidden_dim ** 0.5)
    w1 = jax.random.uniform(k1, (input_dim, hidden_dim), dtype,
                            minval=-bound1, maxval=bound1)
    b1 = jax.random.uniform(k2, (1, hidden_dim), dtype,
                            minval=-bound1, maxval=bound1)
    w2 = jax.random.uniform(k3, (hidden_dim, output_dim), dtype,
                            minval=-bound2, maxval=bound2)
    b2 = jax.random.uniform(k4, (1, output_dim), dtype,
                            minval=-bound2, maxval=bound2)
    return w1, b1, w2, b2


if __name__ == "__main__":
    key = jax.random.PRNGKey(0)
    kx, kp, kx2, kp2, kx3, kp3 = jax.random.split(key, 6)

    # ---- 1) Small demo shape (module spec), f32, resident-weight path. ----
    batch, input_dim, output_dim = 8, 32, 16
    x = jax.random.normal(kx, (batch, input_dim), jnp.float32)
    w1, b1, w2, b2 = init_mlp_params(kp, input_dim, output_dim)

    out = jax.block_until_ready(mlp_forward(x, w1, b1, w2, b2))
    ref = jnp.maximum(x @ w1 + b1, 0.0) @ w2 + b2
    assert out.shape == (batch, output_dim)
    assert out.dtype == x.dtype
    assert jnp.allclose(out, ref, atol=1e-5, rtol=1e-5)

    # ---- 2) Larger shape, bf16 fast path, params prepared once. ----------
    B2, D_in2, D_out2 = 512, 256, 128
    x2 = jax.random.normal(kx2, (B2, D_in2), jnp.float32)
    w1b, b1b, w2b, b2b = init_mlp_params(kp2, D_in2, D_out2)
    prepared = prepare_mlp_params(w1b, b1b, w2b, b2b,
                                  compute_dtype=jnp.bfloat16)
    out2 = jax.block_until_ready(
        mlp_forward_prepared(x2, prepared, tile_b=512))
    # Reference mirrors the kernel's bf16 casts with f32 accumulation.
    xb = x2.astype(jnp.bfloat16)
    h_ref = jnp.maximum(
        jnp.dot(xb, w1b.astype(jnp.bfloat16),
                preferred_element_type=jnp.float32) + b1b, 0.0)
    ref2 = jnp.dot(h_ref.astype(jnp.bfloat16), w2b.astype(jnp.bfloat16),
                   preferred_element_type=jnp.float32) + b2b
    assert out2.shape == (B2, D_out2)
    assert jnp.allclose(out2, ref2, atol=1e-2, rtol=1e-2)

    # ---- 3) Force the D_hid-tiled fallback path (v7x-style budget). ------
    B3, D_in3, D_out3 = 64, 512, 128
    x3 = jax.random.normal(kx3, (B3, D_in3), jnp.float32)
    w1c, b1c, w2c, b2c = init_mlp_params(kp3, D_in3, D_out3)
    out3 = jax.block_until_ready(
        mlp_forward(x3, w1c, b1c, w2c, b2c, hid_tile=128))
    ref3 = jnp.maximum(x3 @ w1c + b1c, 0.0) @ w2c + b2c
    assert out3.shape == (B3, D_out3)
    assert jnp.allclose(out3, ref3, atol=1e-4, rtol=1e-4)

    print("KERNEL_OK")
</pallas_src>

<mosaic_0001>
module attributes {stable_mosaic.version = 11 : i64} {
  func.func @_mlp_kernel(%arg0: i32, %arg1: memref<8x128xf32, #tpu.memory_space<vmem>>, %arg2: memref<128x128xf32, #tpu.memory_space<vmem>>, %arg3: memref<1x128xf32, #tpu.memory_space<vmem>>, %arg4: memref<128x128xf32, #tpu.memory_space<vmem>>, %arg5: memref<1x128xf32, #tpu.memory_space<vmem>>, %arg6: memref<8x128xf32, #tpu.memory_space<vmem>>) attributes {dimension_semantics = [#tpu.dimension_semantics<parallel>], iteration_bounds = array<i64: 1>, scalar_prefetch = 0 : i64, scratch_operands = 0 : i64, tpu.core_type = #tpu.core_type<tc>, window_params = [{transform_indices = @transform_0, window_bounds = array<i64: 8, 128>}, {pipeline_mode = #tpu.pipeline_mode<synchronous>, transform_indices = @transform_1, window_bounds = array<i64: 128, 128>}, {pipeline_mode = #tpu.pipeline_mode<synchronous>, transform_indices = @transform_2, window_bounds = array<i64: 1, 128>}, {pipeline_mode = #tpu.pipeline_mode<synchronous>, transform_indices = @transform_3, window_bounds = array<i64: 128, 128>}, {pipeline_mode = #tpu.pipeline_mode<synchronous>, transform_indices = @transform_4, window_bounds = array<i64: 1, 128>}, {transform_indices = @transform_5, window_bounds = array<i64: 8, 128>}]} {
    %c0 = arith.constant 0 : index
    %c0_0 = arith.constant 0 : index
    %0 = vector.load %arg1[%c0, %c0_0] : memref<8x128xf32, #tpu.memory_space<vmem>>, vector<8x128xf32>
    %c0_1 = arith.constant 0 : index
    %c0_2 = arith.constant 0 : index
    %1 = vector.load %arg2[%c0_1, %c0_2] : memref<128x128xf32, #tpu.memory_space<vmem>>, vector<128x128xf32>
    %cst = arith.constant dense<0.000000e+00> : vector<8x128xf32>
    %2 = tpu.matmul %0, %1, %cst {dimension_numbers = #tpu.dot_dimension_numbers<[1], [0], [0], [1], [0, 0, 1, 1], [], []>} : vector<8x128xf32>, vector<128x128xf32>, vector<8x128xf32> -> vector<8x128xf32>
    %c0_3 = arith.constant 0 : index
    %c0_4 = arith.constant 0 : index
    %3 = vector.load %arg3[%c0_3, %c0_4] : memref<1x128xf32, #tpu.memory_space<vmem>>, vector<1x128xf32>
    %4 = vector.broadcast %3 : vector<1x128xf32> to vector<8x128xf32>
    %5 = arith.addf %2, %4 : vector<8x128xf32>
    %cst_5 = arith.constant 0.000000e+00 : f32
    %6 = vector.broadcast %cst_5 : f32 to vector<8x128xf32>
    %7 = arith.maximumf %5, %6 : vector<8x128xf32>
    %c0_6 = arith.constant 0 : index
    %c0_7 = arith.constant 0 : index
    %8 = vector.load %arg4[%c0_6, %c0_7] : memref<128x128xf32, #tpu.memory_space<vmem>>, vector<128x128xf32>
    %cst_8 = arith.constant dense<0.000000e+00> : vector<8x128xf32>
    %9 = tpu.matmul %7, %8, %cst_8 {dimension_numbers = #tpu.dot_dimension_numbers<[1], [0], [0], [1], [0, 0, 1, 1], [], []>} : vector<8x128xf32>, vector<128x128xf32>, vector<8x128xf32> -> vector<8x128xf32>
    %c0_9 = arith.constant 0 : index
    %c0_10 = arith.constant 0 : index
    %10 = vector.load %arg5[%c0_9, %c0_10] : memref<1x128xf32, #tpu.memory_space<vmem>>, vector<1x128xf32>
    %11 = vector.broadcast %10 : vector<1x128xf32> to vector<8x128xf32>
    %12 = arith.addf %9, %11 : vector<8x128xf32>
    %c0_11 = arith.constant 0 : index
    %c0_12 = arith.constant 0 : index
    %13 = vector.load %arg6[%c0_11, %c0_12] : memref<8x128xf32, #tpu.memory_space<vmem>>, vector<8x128xf32>
    tpu.vector_store %arg6[%c0_11, %c0_12], %12 {strides = array<i32>} : memref<8x128xf32, #tpu.memory_space<vmem>>, vector<8x128xf32>,
    return
  }
  func.func @transform_0(%arg0: i32) -> (i32, i32) {
    %c0_i32 = arith.constant 0 : i32
    %c0_i32_0 = arith.constant 0 : i32
    return %arg0, %c0_i32 : i32, i32
  }
  func.func @transform_1(%arg0: i32) -> (i32, i32) {
    %c0_i32 = arith.constant 0 : i32
    %c0_i32_0 = arith.constant 0 : i32
    %c0_i32_1 = arith.constant 0 : i32
    return %c0_i32, %c0_i32_0 : i32, i32
  }
  func.func @transform_2(%arg0: i32) -> (i32, i32) {
    %c0_i32 = arith.constant 0 : i32
    %c0_i32_0 = arith.constant 0 : i32
    %c0_i32_1 = arith.constant 0 : i32
    return %c0_i32, %c0_i32_0 : i32, i32
  }
  func.func @transform_3(%arg0: i32) -> (i32, i32) {
    %c0_i32 = arith.constant 0 : i32
    %c0_i32_0 = arith.constant 0 : i32
    %c0_i32_1 = arith.constant 0 : i32
    return %c0_i32, %c0_i32_0 : i32, i32
  }
  func.func @transform_4(%arg0: i32) -> (i32, i32) {
    %c0_i32 = arith.constant 0 : i32
    %c0_i32_0 = arith.constant 0 : i32
    %c0_i32_1 = arith.constant 0 : i32
    return %c0_i32, %c0_i32_0 : i32, i32
  }
  func.func @transform_5(%arg0: i32) -> (i32, i32) {
    %c0_i32 = arith.constant 0 : i32
    %c0_i32_0 = arith.constant 0 : i32
    return %arg0, %c0_i32 : i32, i32
  }
}

module attributes {stable_mosaic.version = 11 : i64} {
  func.func @_mlp_kernel(%arg0: i32, %arg1: memref<8x128xf32, #tpu.memory_space<vmem>>, %arg2: memref<128x128xf32, #tpu.memory_space<vmem>>, %arg3: memref<1x128xf32, #tpu.memory_space<vmem>>, %arg4: memref<128x128xf32, #tpu.memory_space<vmem>>, %arg5: memref<1x128xf32, #tpu.memory_space<vmem>>, %arg6: memref<8x128xf32, #tpu.memory_space<vmem>>) attributes {dimension_semantics = [#tpu.dimension_semantics<parallel>], iteration_bounds = array<i64: 1>, scalar_prefetch = 0 : i64, scratch_operands = 0 : i64, tpu.core_type = #tpu.core_type<tc>, window_params = [{transform_indices = @transform_0, window_bounds = array<i64: 8, 128>}, {pipeline_mode = #tpu.pipeline_mode<synchronous>, transform_indices = @transform_1, window_bounds = array<i64: 128, 128>}, {pipeline_mode = #tpu.pipeline_mode<synchronous>, transform_indices = @transform_2, window_bounds = array<i64: 1, 128>}, {pipeline_mode = #tpu.pipeline_mode<synchronous>, transform_indices = @transform_3, window_bounds = array<i64: 128, 128>}, {pipeline_mode = #tpu.pipeline_mode<synchronous>, transform_indices = @transform_4, window_bounds = array<i64: 1, 128>}, {transform_indices = @transform_5, window_bounds = array<i64: 8, 128>}]} {
    %c0 = arith.constant 0 : index
    %c0_0 = arith.constant 0 : index
    %0 = vector.load %arg1[%c0, %c0_0] : memref<8x128xf32, #tpu.memory_space<vmem>>, vector<8x128xf32>
    %c0_1 = arith.constant 0 : index
    %c0_2 = arith.constant 0 : index
    %1 = vector.load %arg2[%c0_1, %c0_2] : memref<128x128xf32, #tpu.memory_space<vmem>>, vector<128x128xf32>
    %cst = arith.constant dense<0.000000e+00> : vector<8x128xf32>
    %2 = tpu.matmul %0, %1, %cst {dimension_numbers = #tpu.dot_dimension_numbers<[1], [0], [0], [1], [0, 0, 1, 1], [], []>} : vector<8x128xf32>, vector<128x128xf32>, vector<8x128xf32> -> vector<8x128xf32>
    %c0_3 = arith.constant 0 : index
    %c0_4 = arith.constant 0 : index
    %3 = vector.load %arg3[%c0_3, %c0_4] : memref<1x128xf32, #tpu.memory_space<vmem>>, vector<1x128xf32>
    %4 = vector.broadcast %3 : vector<1x128xf32> to vector<8x128xf32>
    %5 = arith.addf %2, %4 : vector<8x128xf32>
    %cst_5 = arith.constant 0.000000e+00 : f32
    %6 = vector.broadcast %cst_5 : f32 to vector<8x128xf32>
    %7 = arith.maximumf %5, %6 : vector<8x128xf32>
    %c0_6 = arith.constant 0 : index
    %c0_7 = arith.constant 0 : index
    %8 = vector.load %arg4[%c0_6, %c0_7] : memref<128x128xf32, #tpu.memory_space<vmem>>, vector<128x128xf32>
    %cst_8 = arith.constant dense<0.000000e+00> : vector<8x128xf32>
    %9 = tpu.matmul %7, %8, %cst_8 {dimension_numbers = #tpu.dot_dimension_numbers<[1], [0], [0], [1], [0, 0, 1, 1], [], []>} : vector<8x128xf32>, vector<128x128xf32>, vector<8x128xf32> -> vector<8x128xf32>
    %c0_9 = arith.constant 0 : index
    %c0_10 = arith.constant 0 : index
    %10 = vector.load %arg5[%c0_9, %c0_10] : memref<1x128xf32, #tpu.memory_space<vmem>>, vector<1x128xf32>
    %11 = vector.broadcast %10 : vector<1x128xf32> to vector<8x128xf32>
    %12 = arith.addf %9, %11 : vector<8x128xf32>
    %c0_11 = arith.constant 0 : index
    %c0_12 = arith.constant 0 : index
    %13 = vector.load %arg6[%c0_11, %c0_12] : memref<8x128xf32, #tpu.memory_space<vmem>>, vector<8x128xf32>
    tpu.vector_store %arg6[%c0_11, %c0_12], %12 {strides = array<i32>} : memref<8x128xf32, #tpu.memory_space<vmem>>, vector<8x128xf32>,
    return
  }
  func.func @transform_0(%arg0: i32) -> (i32, i32) {
    %c0_i32 = arith.constant 0 : i32
    %c0_i32_0 = arith.constant 0 : i32
    return %arg0, %c0_i32 : i32, i32
  }
  func.func @transform_1(%arg0: i32) -> (i32, i32) {
    %c0_i32 = arith.constant 0 : i32
    %c0_i32_0 = arith.constant 0 : i32
    %c0_i32_1 = arith.constant 0 : i32
    return %c0_i32, %c0_i32_0 : i32, i32
  }
  func.func @transform_2(%arg0: i32) -> (i32, i32) {
    %c0_i32 = arith.constant 0 : i32
    %c0_i32_0 = arith.constant 0 : i32
    %c0_i32_1 = arith.constant 0 : i32
    return %c0_i32, %c0_i32_0 : i32, i32
  }
  func.func @transform_3(%arg0: i32) -> (i32, i32) {
    %c0_i32 = arith.constant 0 : i32
    %c0_i32_0 = arith.constant 0 : i32
    %c0_i32_1 = arith.constant 0 : i32
    return %c0_i32, %c0_i32_0 : i32, i32
  }
  func.func @transform_4(%arg0: i32) -> (i32, i32) {
    %c0_i32 = arith.constant 0 : i32
    %c0_i32_0 = arith.constant 0 : i32
    %c0_i32_1 = arith.constant 0 : i32
    return %c0_i32, %c0_i32_0 : i32, i32
  }
  func.func @transform_5(%arg0: i32) -> (i32, i32) {
    %c0_i32 = arith.constant 0 : i32
    %c0_i32_0 = arith.constant 0 : i32
    return %arg0, %c0_i32 : i32, i32
  }
}

</mosaic_0001>

<llo_original>
// kernel: tpu_custom_call.1
$region0: #{tpu_custom_call.1}
  #allocation0 [shape = 'u32[]', space=smem, size = 0x4, offset = 0x4, fixed_abs, tag = 'smem constant byte address 0x4 - core index']
  #allocation1 [shape = 'u32[144,128]{1,0:T(1,128)}', space=vmem, size = 0x12000, scoped, tag = 'internal scratch']
  %s0 = inlined_call_operand.hbm [shape: f32[8,128], index: 0, kind: input, shape index: {}]
  %s1 = inlined_call_operand.hbm [shape: f32[128,128], index: 1, kind: input, shape index: {}]
  %s2 = inlined_call_operand.vmem [shape: f32[1,128], index: 2, kind: input, shape index: {}]
  %s3 = inlined_call_operand.hbm [shape: f32[128,128], index: 3, kind: input, shape index: {}]
  %s4 = inlined_call_operand.vmem [shape: f32[1,128], index: 4, kind: input, shape index: {}]
  %s5 = inlined_call_operand.hbm [shape: f32[8,128], index: 5, kind: output, shape index: {}]
  %s6 = sld [smem:[#allocation0]]
  $region42: #{tpu_custom_call.1} parent=0
    _
  %s8 = ssub.s32 1, %s6
  %s9 = scalar_select 0, %s8, %s6
  $region1: #{tpu_custom_call.1} parent=0
    #allocation2 [shape = 'u8[4096]{0}', space=vmem, size = 0x1000, scoped, tag = 'input window, operand 0, single buffered']
    #allocation3 [shape = 's32[1]{0}', space=sflag, size = 0x4, scoped, tag = 'scoped memory for tpu_custom_call.1']
    #allocation4 [shape = 's32[1]{0}', space=sflag, size = 0x4, scoped, tag = 'scoped memory for tpu_custom_call.1']
    #allocation5 [shape = 'u8[65536]{0}', space=vmem, size = 0x10000, scoped, tag = 'input window, operand 1, single buffered']
    #allocation6 [shape = 's32[1]{0}', space=sflag, size = 0x4, scoped, tag = 'scoped memory for tpu_custom_call.1']
    #allocation7 [shape = 'u8[65536]{0}', space=vmem, size = 0x10000, scoped, tag = 'input window, operand 3, single buffered']
    #allocation8 [shape = 'u8[4096]{0}', space=vmem, size = 0x1000, scoped, tag = 'output window, operand 0, single buffered']
    %10 = vsyncpa [#allocation3], 0
    %11 = vsyncpa [#allocation6], 0
    %12 = vsyncpa [#allocation4], 0
    // Predicated region
    $region2: #{tpu_custom_call.1} parent=1 // pred_check
      _
    $region3: #{tpu_custom_call.1} parent=1 // pred_check_branch
      %14 = sbr.rel (0) target = $region5
    $region4: #{tpu_custom_call.1} parent=1 // pred_region
      %s16 = ssub.s32 128, 128
      %17 = vsyncadd [#allocation3], %s16
      %s19 = sshll.u32 [#allocation2], 4
      %s20 = int_to_ptr.vmem [resolvable:$true] %s19
      %22 = dma.hbm_to_vmem [thread:$0]  %s0, 128, %s20, [#allocation3]
    $region5: #{tpu_custom_call.1} parent=1 // pred_fallthru
      _
    // Predicated region
    $region6: #{tpu_custom_call.1} parent=1 // pred_check
      _
    $region7: #{tpu_custom_call.1} parent=1 // pred_check_branch
      %24 = sbr.rel (0) target = $region9
    $region8: #{tpu_custom_call.1} parent=1 // pred_region
      %s26 = ssub.s32 2048, 2048
      %27 = vsyncadd [#allocation6], %s26
      %s28 = sshll.u32 [#allocation5], 4
      %s29 = int_to_ptr.vmem [resolvable:$true] %s28
      %34 = dma.hbm_to_vmem [thread:$0]  %s1, 2048, %s29, [#allocation6], 128, 128, 8
    $region9: #{tpu_custom_call.1} parent=1 // pred_fallthru
      _
    // Predicated region
    $region10: #{tpu_custom_call.1} parent=1 // pred_check
      _
    $region11: #{tpu_custom_call.1} parent=1 // pred_check_branch
      %36 = sbr.rel (0) target = $region13
    $region12: #{tpu_custom_call.1} parent=1 // pred_region
      _
    $region13: #{tpu_custom_call.1} parent=1 // pred_fallthru
      _
    // Predicated region
    $region14: #{tpu_custom_call.1} parent=1 // pred_check
      _
    $region15: #{tpu_custom_call.1} parent=1 // pred_check_branch
      %38 = sbr.rel (0) target = $region17
    $region16: #{tpu_custom_call.1} parent=1 // pred_region
      %s40 = ssub.s32 2048, 2048
      %41 = vsyncadd [#allocation6], %s40
      %s42 = sshll.u32 [#allocation7], 4
      %s43 = int_to_ptr.vmem [resolvable:$true] %s42
      %48 = dma.hbm_to_vmem [thread:$0]  %s3, 2048, %s43, [#allocation6], 128, 128, 8
    $region17: #{tpu_custom_call.1} parent=1 // pred_fallthru
      _
    // Predicated region
    $region18: #{tpu_custom_call.1} parent=1 // pred_check
      _
    $region19: #{tpu_custom_call.1} parent=1 // pred_check_branch
      %50 = sbr.rel (0) target = $region21
    $region20: #{tpu_custom_call.1} parent=1 // pred_region
      _
    $region21: #{tpu_custom_call.1} parent=1 // pred_fallthru
      _
    // Predicated region
    $region22: #{tpu_custom_call.1} parent=1 // pred_check
      _
    $region23: #{tpu_custom_call.1} parent=1 // pred_check_branch
      %52 = sbr.rel (0) target = $region25
    $region24: #{tpu_custom_call.1} parent=1 // pred_region
      %53 = dma.done [#allocation3], 128
    $region25: #{tpu_custom_call.1} parent=1 // pred_fallthru
      _
    // Predicated region
    $region26: #{tpu_custom_call.1} parent=1 // pred_check
      _
    $region27: #{tpu_custom_call.1} parent=1 // pred_check_branch
      %55 = sbr.rel (0) target = $region29
    $region28: #{tpu_custom_call.1} parent=1 // pred_region
      %56 = dma.done [#allocation6], 2048
    $region29: #{tpu_custom_call.1} parent=1 // pred_fallthru
      _
    // Predicated region
    $region30: #{tpu_custom_call.1} parent=1 // pred_check
      _
    $region31: #{tpu_custom_call.1} parent=1 // pred_check_branch
      %58 = sbr.rel (0) target = $region33
    $region32: #{tpu_custom_call.1} parent=1 // pred_region
      %59 = dma.done [#allocation6], 2048
    $region33: #{tpu_custom_call.1} parent=1 // pred_fallthru
      _
    %v60 = vld [vmem:[#allocation2] sm:$0xff]
    %v61 = vld [vmem:[#allocation5] sm:$0xff]
    %v62 = vld [vmem:[#allocation5 + $0x8] sm:$0xff]
    %v63 = vld [vmem:[#allocation5 + $0x10] sm:$0xff]
    %v64 = vld [vmem:[#allocation5 + $0x18] sm:$0xff]
    %v65 = vld [vmem:[#allocation5 + $0x20] sm:$0xff]
    %v66 = vld [vmem:[#allocation5 + $0x28] sm:$0xff]
    %v67 = vld [vmem:[#allocation5 + $0x30] sm:$0xff]
    %v68 = vld [vmem:[#allocation5 + $0x38] sm:$0xff]
    %v69 = vld [vmem:[#allocation5 + $0x40] sm:$0xff]
    %v70 = vld [vmem:[#allocation5 + $0x48] sm:$0xff]
    %v71 = vld [vmem:[#allocation5 + $0x50] sm:$0xff]
    %v72 = vld [vmem:[#allocation5 + $0x58] sm:$0xff]
    %v73 = vld [vmem:[#allocation5 + $0x60] sm:$0xff]
    %v74 = vld [vmem:[#allocation5 + $0x68] sm:$0xff]
    %v75 = vld [vmem:[#allocation5 + $0x70] sm:$0xff]
    %v76 = vld [vmem:[#allocation5 + $0x78] sm:$0xff]
    %v77 = vld [vmem:[%s2] sm:$0x1]
    %v79 = vlaneseq
    %v80 = vshrl.u32 %v79, 7
    %v81 = vsub.s32 0, %v80
    %v82 = vrot.slane %v77, %v81
    %84 = vmatprep.subr.mxu0 0.0
    %85 = vmatpush1.msra.mxu0 %v76
    %86 = vmatprep.subr.mxu0 0.0
    %87 = vmatpush1.msra.mxu0 %v75
    %88 = vmatprep.subr.mxu0 0.0
    %89 = vmatpush1.msra.mxu0 %v74
    %90 = vmatprep.subr.mxu0 0.0
    %91 = vmatpush1.msra.mxu0 %v73
    %92 = vmatprep.subr.mxu0 0.0
    %93 = vmatpush1.msra.mxu0 %v72
    %94 = vmatprep.subr.mxu0 0.0
    %95 = vmatpush1.msra.mxu0 %v71
    %96 = vmatprep.subr.mxu0 0.0
    %97 = vmatpush1.msra.mxu0 %v70
    %98 = vmatprep.subr.mxu0 0.0
    %99 = vmatpush1.msra.mxu0 %v69
    %100 = vmatprep.subr.mxu0 0.0
    %101 = vmatpush1.msra.mxu0 %v68
    %102 = vmatprep.subr.mxu0 0.0
    %103 = vmatpush1.msra.mxu0 %v67
    %104 = vmatprep.subr.mxu0 0.0
    %105 = vmatpush1.msra.mxu0 %v66
    %106 = vmatprep.subr.mxu0 0.0
    %107 = vmatpush1.msra.mxu0 %v65
    %108 = vmatprep.subr.mxu0 0.0
    %109 = vmatpush1.msra.mxu0 %v64
    %110 = vmatprep.subr.mxu0 0.0
    %111 = vmatpush1.msra.mxu0 %v63
    %112 = vmatprep.subr.mxu0 0.0
    %113 = vmatpush1.msra.mxu0 %v62
    %114 = vmatprep.subr.mxu0 0.0
    %115 = vmatpush1.msra.mxu0 %v61
    %116 = vmatprep.subr.mxu0 0.0
    %117 = vmatpush2.msra.mxu0 0.0
    %118 = vmatprep.subr.mxu0 0.0
    %119 = vmatpush2.msra.mxu0 0.0
    %120 = vmatprep.subr.mxu0 0.0
    %121 = vmatpush2.msra.mxu0 0.0
    %122 = vmatprep.subr.mxu0 0.0
    %123 = vmatpush2.msra.mxu0 0.0
    %124 = vmatprep.subr.mxu0 0.0
    %125 = vmatpush2.msra.mxu0 0.0
    %126 = vmatprep.subr.mxu0 0.0
    %127 = vmatpush2.msra.mxu0 0.0
    %128 = vmatprep.subr.mxu0 0.0
    %129 = vmatpush2.msra.mxu0 0.0
    %130 = vmatprep.subr.mxu0 0.0
    %131 = vmatpush2.msra.mxu0 0.0
    %132 = vmatprep.subr.mxu0 0.0
    %133 = vmatpush2.msra.mxu0 0.0
    %134 = vmatprep.subr.mxu0 0.0
    %135 = vmatpush2.msra.mxu0 0.0
    %136 = vmatprep.subr.mxu0 0.0
    %137 = vmatpush2.msra.mxu0 0.0
    %138 = vmatprep.subr.mxu0 0.0
    %139 = vmatpush2.msra.mxu0 0.0
    %140 = vmatprep.subr.mxu0 0.0
    %141 = vmatpush2.msra.mxu0 0.0
    %142 = vmatprep.subr.mxu0 0.0
    %143 = vmatpush2.msra.mxu0 0.0
    %144 = vmatprep.subr.mxu0 0.0
    %145 = vmatpush2.msra.mxu0 0.0
    %146 = vmatprep.subr.mxu0 0.0
    %147 = vmatpush2.msra.mxu0 0.0
    %148 = vmatprep.mubr.f32.mxu0 0.0
    %149 = vmatmul.mubr.f32.gmra.mxu0 %v60
    %v150 = vpop.f32.mrf.mxu0
    %v151 = vadd.f32 %v82, %v150
    %v152 = vpop.f32.mrf.mxu0
    %153 = vdwg.mxu0
    %v154 = vmax.f32 %v151, 0.0
    %v155 = vld [vmem:[#allocation7] sm:$0xff]
    %v156 = vld [vmem:[#allocation7 + $0x8] sm:$0xff]
    %v157 = vld [vmem:[#allocation7 + $0x10] sm:$0xff]
    %v158 = vld [vmem:[#allocation7 + $0x18] sm:$0xff]
    %v159 = vld [vmem:[#allocation7 + $0x20] sm:$0xff]
    %v160 = vld [vmem:[#allocation7 + $0x28] sm:$0xff]
    %v161 = vld [vmem:[#allocation7 + $0x30] sm:$0xff]
    %v162 = vld [vmem:[#allocation7 + $0x38] sm:$0xff]
    %v163 = vld [vmem:[#allocation7 + $0x40] sm:$0xff]
    %v164 = vld [vmem:[#allocation7 + $0x48] sm:$0xff]
    %v165 = vld [vmem:[#allocation7 + $0x50] sm:$0xff]
    %v166 = vld [vmem:[#allocation7 + $0x58] sm:$0xff]
    %v167 = vld [vmem:[#allocation7 + $0x60] sm:$0xff]
    %v168 = vld [vmem:[#allocation7 + $0x68] sm:$0xff]
    %v169 = vld [vmem:[#allocation7 + $0x70] sm:$0xff]
    %v170 = vld [vmem:[#allocation7 + $0x78] sm:$0xff]
    %v171 = vld [vmem:[%s4] sm:$0x1]
    %v173 = vlaneseq
    %v174 = vshrl.u32 %v173, 7
    %v175 = vsub.s32 0, %v174
    %v176 = vrot.slane %v171, %v175
    %178 = vmatprep.subr.mxu0 0.0
    %179 = vmatpush1.msra.mxu0 %v170
    %180 = vmatprep.subr.mxu0 0.0
    %181 = vmatpush1.msra.mxu0 %v169
    %182 = vmatprep.subr.mxu0 0.0
    %183 = vmatpush1.msra.mxu0 %v168
    %184 = vmatprep.subr.mxu0 0.0
    %185 = vmatpush1.msra.mxu0 %v167
    %186 = vmatprep.subr.mxu0 0.0
    %187 = vmatpush1.msra.mxu0 %v166
    %188 = vmatprep.subr.mxu0 0.0
    %189 = vmatpush1.msra.mxu0 %v165
    %190 = vmatprep.subr.mxu0 0.0
    %191 = vmatpush1.msra.mxu0 %v164
    %192 = vmatprep.subr.mxu0 0.0
    %193 = vmatpush1.msra.mxu0 %v163
    %194 = vmatprep.subr.mxu0 0.0
    %195 = vmatpush1.msra.mxu0 %v162
    %196 = vmatprep.subr.mxu0 0.0
    %197 = vmatpush1.msra.mxu0 %v161
    %198 = vmatprep.subr.mxu0 0.0
    %199 = vmatpush1.msra.mxu0 %v160
    %200 = vmatprep.subr.mxu0 0.0
    %201 = vmatpush1.msra.mxu0 %v159
    %202 = vmatprep.subr.mxu0 0.0
    %203 = vmatpush1.msra.mxu0 %v158
    %204 = vmatprep.subr.mxu0 0.0
    %205 = vmatpush1.msra.mxu0 %v157
    %206 = vmatprep.subr.mxu0 0.0
    %207 = vmatpush1.msra.mxu0 %v156
    %208 = vmatprep.subr.mxu0 0.0
    %209 = vmatpush1.msra.mxu0 %v155
    %210 = vmatprep.subr.mxu0 0.0
    %211 = vmatpush2.msra.mxu0 0.0
    %212 = vmatprep.subr.mxu0 0.0
    %213 = vmatpush2.msra.mxu0 0.0
    %214 = vmatprep.subr.mxu0 0.0
    %215 = vmatpush2.msra.mxu0 0.0
    %216 = vmatprep.subr.mxu0 0.0
    %217 = vmatpush2.msra.mxu0 0.0
    %218 = vmatprep.subr.mxu0 0.0
    %219 = vmatpush2.msra.mxu0 0.0
    %220 = vmatprep.subr.mxu0 0.0
    %221 = vmatpush2.msra.mxu0 0.0
    %222 = vmatprep.subr.mxu0 0.0
    %223 = vmatpush2.msra.mxu0 0.0
    %224 = vmatprep.subr.mxu0 0.0
    %225 = vmatpush2.msra.mxu0 0.0
    %226 = vmatprep.subr.mxu0 0.0
    %227 = vmatpush2.msra.mxu0 0.0
    %228 = vmatprep.subr.mxu0 0.0
    %229 = vmatpush2.msra.mxu0 0.0
    %230 = vmatprep.subr.mxu0 0.0
    %231 = vmatpush2.msra.mxu0 0.0
    %232 = vmatprep.subr.mxu0 0.0
    %233 = vmatpush2.msra.mxu0 0.0
    %234 = vmatprep.subr.mxu0 0.0
    %235 = vmatpush2.msra.mxu0 0.0
    %236 = vmatprep.subr.mxu0 0.0
    %237 = vmatpush2.msra.mxu0 0.0
    %238 = vmatprep.subr.mxu0 0.0
    %239 = vmatpush2.msra.mxu0 0.0
    %240 = vmatprep.subr.mxu0 0.0
    %241 = vmatpush2.msra.mxu0 0.0
    %242 = vmatprep.mubr.f32.mxu0 0.0
    %243 = vmatmul.mubr.f32.gmra.mxu0 %v154
    %v244 = vpop.f32.mrf.mxu0
    %v245 = vadd.f32 %v176, %v244
    %v246 = vpop.f32.mrf.mxu0
    %247 = vdwg.mxu0
    %248 = vst [vmem:[#allocation8] sm:$0xff] %v245
    // Predicated region
    $region34: #{tpu_custom_call.1} parent=1 // pred_check
      _
    $region35: #{tpu_custom_call.1} parent=1 // pred_check_branch
      %250 = sbr.rel (0) target = $region37
    $region36: #{tpu_custom_call.1} parent=1 // pred_region
      %s252 = ssub.s32 128, 128
      %253 = vsyncadd [#allocation4], %s252
      %s255 = sshll.u32 [#allocation8], 4
      %s256 = int_to_ptr.vmem [resolvable:$true] %s255
      %258 = dma.vmem_to_hbm [thread:$0]  %s256, 128, %s5, [#allocation4]
    $region37: #{tpu_custom_call.1} parent=1 // pred_fallthru
      _
    // Predicated region
    $region38: #{tpu_custom_call.1} parent=1 // pred_check
      _
    $region39: #{tpu_custom_call.1} parent=1 // pred_check_branch
      %260 = sbr.rel (0) target = $region41
    $region40: #{tpu_custom_call.1} parent=1 // pred_region
      %261 = dma.done [#allocation4], 128
    $region41: #{tpu_custom_call.1} parent=1 // pred_fallthru
      _
    %262 = vsyncpa [#allocation3], 1
    %263 = vsyncpa [#allocation6], 1
    %264 = vsyncpa [#allocation4], 1

// kernel: tpu_custom_call.1
$region0: #{tpu_custom_call.1}
  #allocation0 [shape = 'u32[]', space=smem, size = 0x4, offset = 0x4, fixed_abs, tag = 'smem constant byte address 0x4 - core index']
  #allocation1 [shape = 'u32[144,128]{1,0:T(1,128)}', space=vmem, size = 0x12000, scoped, tag = 'internal scratch']
  %s0 = inlined_call_operand.hbm [shape: f32[8,128], index: 0, kind: input, shape index: {}]
  %s1 = inlined_call_operand.hbm [shape: f32[128,128], index: 1, kind: input, shape index: {}]
  %s2 = inlined_call_operand.vmem [shape: f32[1,128], index: 2, kind: input, shape index: {}]
  %s3 = inlined_call_operand.hbm [shape: f32[128,128], index: 3, kind: input, shape index: {}]
  %s4 = inlined_call_operand.vmem [shape: f32[1,128], index: 4, kind: input, shape index: {}]
  %s5 = inlined_call_operand.hbm [shape: f32[8,128], index: 5, kind: output, shape index: {}]
  %s6 = sld [smem:[#allocation0]]
  $region42: #{tpu_custom_call.1} parent=0
    _
  %s8 = ssub.s32 1, %s6
  %s9 = scalar_select 0, %s8, %s6
  $region1: #{tpu_custom_call.1} parent=0
    #allocation2 [shape = 'u8[4096]{0}', space=vmem, size = 0x1000, scoped, tag = 'input window, operand 0, single buffered']
    #allocation3 [shape = 's32[1]{0}', space=sflag, size = 0x4, scoped, tag = 'scoped memory for tpu_custom_call.1']
    #allocation4 [shape = 's32[1]{0}', space=sflag, size = 0x4, scoped, tag = 'scoped memory for tpu_custom_call.1']
    #allocation5 [shape = 'u8[65536]{0}', space=vmem, size = 0x10000, scoped, tag = 'input window, operand 1, single buffered']
    #allocation6 [shape = 's32[1]{0}', space=sflag, size = 0x4, scoped, tag = 'scoped memory for tpu_custom_call.1']
    #allocation7 [shape = 'u8[65536]{0}', space=vmem, size = 0x10000, scoped, tag = 'input window, operand 3, single buffered']
    #allocation8 [shape = 'u8[4096]{0}', space=vmem, size = 0x1000, scoped, tag = 'output window, operand 0, single buffered']
    %10 = vsyncpa [#allocation3], 0
    %11 = vsyncpa [#allocation6], 0
    %12 = vsyncpa [#allocation4], 0
    // Predicated region
    $region2: #{tpu_custom_call.1} parent=1 // pred_check
      _
    $region3: #{tpu_custom_call.1} parent=1 // pred_check_branch
      %14 = sbr.rel (0) target = $region5
    $region4: #{tpu_custom_call.1} parent=1 // pred_region
      %s16 = ssub.s32 128, 128
      %17 = vsyncadd [#allocation3], %s16
      %s19 = sshll.u32 [#allocation2], 4
      %s20 = int_to_ptr.vmem [resolvable:$true] %s19
      %22 = dma.hbm_to_vmem [thread:$0]  %s0, 128, %s20, [#allocation3]
    $region5: #{tpu_custom_call.1} parent=1 // pred_fallthru
      _
    // Predicated region
    $region6: #{tpu_custom_call.1} parent=1 // pred_check
      _
    $region7: #{tpu_custom_call.1} parent=1 // pred_check_branch
      %24 = sbr.rel (0) target = $region9
    $region8: #{tpu_custom_call.1} parent=1 // pred_region
      %s26 = ssub.s32 2048, 2048
      %27 = vsyncadd [#allocation6], %s26
      %s28 = sshll.u32 [#allocation5], 4
      %s29 = int_to_ptr.vmem [resolvable:$true] %s28
      %34 = dma.hbm_to_vmem [thread:$0]  %s1, 2048, %s29, [#allocation6], 128, 128, 8
    $region9: #{tpu_custom_call.1} parent=1 // pred_fallthru
      _
    // Predicated region
    $region10: #{tpu_custom_call.1} parent=1 // pred_check
      _
    $region11: #{tpu_custom_call.1} parent=1 // pred_check_branch
      %36 = sbr.rel (0) target = $region13
    $region12: #{tpu_custom_call.1} parent=1 // pred_region
      _
    $region13: #{tpu_custom_call.1} parent=1 // pred_fallthru
      _
    // Predicated region
    $region14: #{tpu_custom_call.1} parent=1 // pred_check
      _
    $region15: #{tpu_custom_call.1} parent=1 // pred_check_branch
      %38 = sbr.rel (0) target = $region17
    $region16: #{tpu_custom_call.1} parent=1 // pred_region
      %s40 = ssub.s32 2048, 2048
      %41 = vsyncadd [#allocation6], %s40
      %s42 = sshll.u32 [#allocation7], 4
      %s43 = int_to_ptr.vmem [resolvable:$true] %s42
      %48 = dma.hbm_to_vmem [thread:$0]  %s3, 2048, %s43, [#allocation6], 128, 128, 8
    $region17: #{tpu_custom_call.1} parent=1 // pred_fallthru
      _
    // Predicated region
    $region18: #{tpu_custom_call.1} parent=1 // pred_check
      _
    $region19: #{tpu_custom_call.1} parent=1 // pred_check_branch
      %50 = sbr.rel (0) target = $region21
    $region20: #{tpu_custom_call.1} parent=1 // pred_region
      _
    $region21: #{tpu_custom_call.1} parent=1 // pred_fallthru
      _
    // Predicated region
    $region22: #{tpu_custom_call.1} parent=1 // pred_check
      _
    $region23: #{tpu_custom_call.1} parent=1 // pred_check_branch
      %52 = sbr.rel (0) target = $region25
    $region24: #{tpu_custom_call.1} parent=1 // pred_region
      %53 = dma.done [#allocation3], 128
    $region25: #{tpu_custom_call.1} parent=1 // pred_fallthru
      _
    // Predicated region
    $region26: #{tpu_custom_call.1} parent=1 // pred_check
      _
    $region27: #{tpu_custom_call.1} parent=1 // pred_check_branch
      %55 = sbr.rel (0) target = $region29
    $region28: #{tpu_custom_call.1} parent=1 // pred_region
      %56 = dma.done [#allocation6], 2048
    $region29: #{tpu_custom_call.1} parent=1 // pred_fallthru
      _
    // Predicated region
    $region30: #{tpu_custom_call.1} parent=1 // pred_check
      _
    $region31: #{tpu_custom_call.1} parent=1 // pred_check_branch
      %58 = sbr.rel (0) target = $region33
    $region32: #{tpu_custom_call.1} parent=1 // pred_region
      %59 = dma.done [#allocation6], 2048
    $region33: #{tpu_custom_call.1} parent=1 // pred_fallthru
      _
    %v60 = vld [vmem:[#allocation2] sm:$0xff]
    %v61 = vld [vmem:[#allocation5] sm:$0xff]
    %v62 = vld [vmem:[#allocation5 + $0x8] sm:$0xff]
    %v63 = vld [vmem:[#allocation5 + $0x10] sm:$0xff]
    %v64 = vld [vmem:[#allocation5 + $0x18] sm:$0xff]
    %v65 = vld [vmem:[#allocation5 + $0x20] sm:$0xff]
    %v66 = vld [vmem:[#allocation5 + $0x28] sm:$0xff]
    %v67 = vld [vmem:[#allocation5 + $0x30] sm:$0xff]
    %v68 = vld [vmem:[#allocation5 + $0x38] sm:$0xff]
    %v69 = vld [vmem:[#allocation5 + $0x40] sm:$0xff]
    %v70 = vld [vmem:[#allocation5 + $0x48] sm:$0xff]
    %v71 = vld [vmem:[#allocation5 + $0x50] sm:$0xff]
    %v72 = vld [vmem:[#allocation5 + $0x58] sm:$0xff]
    %v73 = vld [vmem:[#allocation5 + $0x60] sm:$0xff]
    %v74 = vld [vmem:[#allocation5 + $0x68] sm:$0xff]
    %v75 = vld [vmem:[#allocation5 + $0x70] sm:$0xff]
    %v76 = vld [vmem:[#allocation5 + $0x78] sm:$0xff]
    %v77 = vld [vmem:[%s2] sm:$0x1]
    %v79 = vlaneseq
    %v80 = vshrl.u32 %v79, 7
    %v81 = vsub.s32 0, %v80
    %v82 = vrot.slane %v77, %v81
    %84 = vmatprep.subr.mxu0 0.0
    %85 = vmatpush1.msra.mxu0 %v76
    %86 = vmatprep.subr.mxu0 0.0
    %87 = vmatpush1.msra.mxu0 %v75
    %88 = vmatprep.subr.mxu0 0.0
    %89 = vmatpush1.msra.mxu0 %v74
    %90 = vmatprep.subr.mxu0 0.0
    %91 = vmatpush1.msra.mxu0 %v73
    %92 = vmatprep.subr.mxu0 0.0
    %93 = vmatpush1.msra.mxu0 %v72
    %94 = vmatprep.subr.mxu0 0.0
    %95 = vmatpush1.msra.mxu0 %v71
    %96 = vmatprep.subr.mxu0 0.0
    %97 = vmatpush1.msra.mxu0 %v70
    %98 = vmatprep.subr.mxu0 0.0
    %99 = vmatpush1.msra.mxu0 %v69
    %100 = vmatprep.subr.mxu0 0.0
    %101 = vmatpush1.msra.mxu0 %v68
    %102 = vmatprep.subr.mxu0 0.0
    %103 = vmatpush1.msra.mxu0 %v67
    %104 = vmatprep.subr.mxu0 0.0
    %105 = vmatpush1.msra.mxu0 %v66
    %106 = vmatprep.subr.mxu0 0.0
    %107 = vmatpush1.msra.mxu0 %v65
    %108 = vmatprep.subr.mxu0 0.0
    %109 = vmatpush1.msra.mxu0 %v64
    %110 = vmatprep.subr.mxu0 0.0
    %111 = vmatpush1.msra.mxu0 %v63
    %112 = vmatprep.subr.mxu0 0.0
    %113 = vmatpush1.msra.mxu0 %v62
    %114 = vmatprep.subr.mxu0 0.0
    %115 = vmatpush1.msra.mxu0 %v61
    %116 = vmatprep.subr.mxu0 0.0
    %117 = vmatpush2.msra.mxu0 0.0
    %118 = vmatprep.subr.mxu0 0.0
    %119 = vmatpush2.msra.mxu0 0.0
    %120 = vmatprep.subr.mxu0 0.0
    %121 = vmatpush2.msra.mxu0 0.0
    %122 = vmatprep.subr.mxu0 0.0
    %123 = vmatpush2.msra.mxu0 0.0
    %124 = vmatprep.subr.mxu0 0.0
    %125 = vmatpush2.msra.mxu0 0.0
    %126 = vmatprep.subr.mxu0 0.0
    %127 = vmatpush2.msra.mxu0 0.0
    %128 = vmatprep.subr.mxu0 0.0
    %129 = vmatpush2.msra.mxu0 0.0
    %130 = vmatprep.subr.mxu0 0.0
    %131 = vmatpush2.msra.mxu0 0.0
    %132 = vmatprep.subr.mxu0 0.0
    %133 = vmatpush2.msra.mxu0 0.0
    %134 = vmatprep.subr.mxu0 0.0
    %135 = vmatpush2.msra.mxu0 0.0
    %136 = vmatprep.subr.mxu0 0.0
    %137 = vmatpush2.msra.mxu0 0.0
    %138 = vmatprep.subr.mxu0 0.0
    %139 = vmatpush2.msra.mxu0 0.0
    %140 = vmatprep.subr.mxu0 0.0
    %141 = vmatpush2.msra.mxu0 0.0
    %142 = vmatprep.subr.mxu0 0.0
    %143 = vmatpush2.msra.mxu0 0.0
    %144 = vmatprep.subr.mxu0 0.0
    %145 = vmatpush2.msra.mxu0 0.0
    %146 = vmatprep.subr.mxu0 0.0
    %147 = vmatpush2.msra.mxu0 0.0
    %148 = vmatprep.mubr.f32.mxu0 0.0
    %149 = vmatmul.mubr.f32.gmra.mxu0 %v60
    %v150 = vpop.f32.mrf.mxu0
    %v151 = vadd.f32 %v82, %v150
    %v152 = vpop.f32.mrf.mxu0
    %153 = vdwg.mxu0
    %v154 = vmax.f32 %v151, 0.0
    %v155 = vld [vmem:[#allocation7] sm:$0xff]
    %v156 = vld [vmem:[#allocation7 + $0x8] sm:$0xff]
    %v157 = vld [vmem:[#allocation7 + $0x10] sm:$0xff]
    %v158 = vld [vmem:[#allocation7 + $0x18] sm:$0xff]
    %v159 = vld [vmem:[#allocation7 + $0x20] sm:$0xff]
    %v160 = vld [vmem:[#allocation7 + $0x28] sm:$0xff]
    %v161 = vld [vmem:[#allocation7 + $0x30] sm:$0xff]
    %v162 = vld [vmem:[#allocation7 + $0x38] sm:$0xff]
    %v163 = vld [vmem:[#allocation7 + $0x40] sm:$0xff]
    %v164 = vld [vmem:[#allocation7 + $0x48] sm:$0xff]
    %v165 = vld [vmem:[#allocation7 + $0x50] sm:$0xff]
    %v166 = vld [vmem:[#allocation7 + $0x58] sm:$0xff]
    %v167 = vld [vmem:[#allocation7 + $0x60] sm:$0xff]
    %v168 = vld [vmem:[#allocation7 + $0x68] sm:$0xff]
    %v169 = vld [vmem:[#allocation7 + $0x70] sm:$0xff]
    %v170 = vld [vmem:[#allocation7 + $0x78] sm:$0xff]
    %v171 = vld [vmem:[%s4] sm:$0x1]
    %v173 = vlaneseq
    %v174 = vshrl.u32 %v173, 7
    %v175 = vsub.s32 0, %v174
    %v176 = vrot.slane %v171, %v175
    %178 = vmatprep.subr.mxu0 0.0
    %179 = vmatpush1.msra.mxu0 %v170
    %180 = vmatprep.subr.mxu0 0.0
    %181 = vmatpush1.msra.mxu0 %v169
    %182 = vmatprep.subr.mxu0 0.0
    %183 = vmatpush1.msra.mxu0 %v168
    %184 = vmatprep.subr.mxu0 0.0
    %185 = vmatpush1.msra.mxu0 %v167
    %186 = vmatprep.subr.mxu0 0.0
    %187 = vmatpush1.msra.mxu0 %v166
    %188 = vmatprep.subr.mxu0 0.0
    %189 = vmatpush1.msra.mxu0 %v165
    %190 = vmatprep.subr.mxu0 0.0
    %191 = vmatpush1.msra.mxu0 %v164
    %192 = vmatprep.subr.mxu0 0.0
    %193 = vmatpush1.msra.mxu0 %v163
    %194 = vmatprep.subr.mxu0 0.0
    %195 = vmatpush1.msra.mxu0 %v162
    %196 = vmatprep.subr.mxu0 0.0
    %197 = vmatpush1.msra.mxu0 %v161
    %198 = vmatprep.subr.mxu0 0.0
    %199 = vmatpush1.msra.mxu0 %v160
    %200 = vmatprep.subr.mxu0 0.0
    %201 = vmatpush1.msra.mxu0 %v159
    %202 = vmatprep.subr.mxu0 0.0
    %203 = vmatpush1.msra.mxu0 %v158
    %204 = vmatprep.subr.mxu0 0.0
    %205 = vmatpush1.msra.mxu0 %v157
    %206 = vmatprep.subr.mxu0 0.0
    %207 = vmatpush1.msra.mxu0 %v156
    %208 = vmatprep.subr.mxu0 0.0
    %209 = vmatpush1.msra.mxu0 %v155
    %210 = vmatprep.subr.mxu0 0.0
    %211 = vmatpush2.msra.mxu0 0.0
    %212 = vmatprep.subr.mxu0 0.0
    %213 = vmatpush2.msra.mxu0 0.0
    %214 = vmatprep.subr.mxu0 0.0
    %215 = vmatpush2.msra.mxu0 0.0
    %216 = vmatprep.subr.mxu0 0.0
    %217 = vmatpush2.msra.mxu0 0.0
    %218 = vmatprep.subr.mxu0 0.0
    %219 = vmatpush2.msra.mxu0 0.0
    %220 = vmatprep.subr.mxu0 0.0
    %221 = vmatpush2.msra.mxu0 0.0
    %222 = vmatprep.subr.mxu0 0.0
    %223 = vmatpush2.msra.mxu0 0.0
    %224 = vmatprep.subr.mxu0 0.0
    %225 = vmatpush2.msra.mxu0 0.0
    %226 = vmatprep.subr.mxu0 0.0
    %227 = vmatpush2.msra.mxu0 0.0
    %228 = vmatprep.subr.mxu0 0.0
    %229 = vmatpush2.msra.mxu0 0.0
    %230 = vmatprep.subr.mxu0 0.0
    %231 = vmatpush2.msra.mxu0 0.0
    %232 = vmatprep.subr.mxu0 0.0
    %233 = vmatpush2.msra.mxu0 0.0
    %234 = vmatprep.subr.mxu0 0.0
    %235 = vmatpush2.msra.mxu0 0.0
    %236 = vmatprep.subr.mxu0 0.0
    %237 = vmatpush2.msra.mxu0 0.0
    %238 = vmatprep.subr.mxu0 0.0
    %239 = vmatpush2.msra.mxu0 0.0
    %240 = vmatprep.subr.mxu0 0.0
    %241 = vmatpush2.msra.mxu0 0.0
    %242 = vmatprep.mubr.f32.mxu0 0.0
    %243 = vmatmul.mubr.f32.gmra.mxu0 %v154
    %v244 = vpop.f32.mrf.mxu0
    %v245 = vadd.f32 %v176, %v244
    %v246 = vpop.f32.mrf.mxu0
    %247 = vdwg.mxu0
    %248 = vst [vmem:[#allocation8] sm:$0xff] %v245
    // Predicated region
    $region34: #{tpu_custom_call.1} parent=1 // pred_check
      _
    $region35: #{tpu_custom_call.1} parent=1 // pred_check_branch
      %250 = sbr.rel (0) target = $region37
    $region36: #{tpu_custom_call.1} parent=1 // pred_region
      %s252 = ssub.s32 128, 128
      %253 = vsyncadd [#allocation4], %s252
      %s255 = sshll.u32 [#allocation8], 4
      %s256 = int_to_ptr.vmem [resolvable:$true] %s255
      %258 = dma.vmem_to_hbm [thread:$0]  %s256, 128, %s5, [#allocation4]
    $region37: #{tpu_custom_call.1} parent=1 // pred_fallthru
      _
    // Predicated region
    $region38: #{tpu_custom_call.1} parent=1 // pred_check
      _
    $region39: #{tpu_custom_call.1} parent=1 // pred_check_branch
      %260 = sbr.rel (0) target = $region41
    $region40: #{tpu_custom_call.1} parent=1 // pred_region
      %261 = dma.done [#allocation4], 128
    $region41: #{tpu_custom_call.1} parent=1 // pred_fallthru
      _
    %262 = vsyncpa [#allocation3], 1
    %263 = vsyncpa [#allocation6], 1
    %264 = vsyncpa [#allocation4], 1

</llo_original>
